<compile_context>
chip_gen: v6e
topology: v6e:2x2x1
jax: 0.10.0
libtpu: 0.0.40
codegen_flags: <defaults>
</compile_context>

<pallas_src>
import jax
import jax.numpy as jnp
from jax.experimental import pallas as pl
from jax.experimental.pallas import tpu as pltpu


def se_block_kernel(x_ref, w1_ref, b1_ref, w2_ref, b2_ref, o_ref):
    # x_ref: (C, HW) lane-dense slab for the current batch element.
    C, HW = x_ref.shape
    x = x_ref[...]                                   # keep input dtype (no slab upcast)

    # --- squeeze: avg / max pool over the spatial (lane) axis, f32 accumulation ---
    pooled_avg = jnp.sum(x, axis=-1, keepdims=True, dtype=jnp.float32) * (1.0 / HW)
    pooled_max = jnp.max(x, axis=-1, keepdims=True).astype(jnp.float32)
    pooled = jnp.concatenate([pooled_avg, pooled_max], axis=1)        # (C, 2)

    # --- excite: shared 2-layer MLP, both branches in one pair of matmuls ---
    w1 = w1_ref[...].astype(jnp.float32)             # (Cr, C)
    b1 = b1_ref[...].astype(jnp.float32)             # (Cr, 1)
    w2 = w2_ref[...].astype(jnp.float32)             # (C, Cr)
    b2 = b2_ref[...].astype(jnp.float32)             # (C, 1)

    h = jnp.maximum(
        jnp.dot(w1, pooled, preferred_element_type=jnp.float32) + b1, 0.0)   # (Cr, 2)
    out = jnp.dot(w2, h, preferred_element_type=jnp.float32) + b2            # (C, 2)
    logits = out[:, 0:1] + out[:, 1:2]                                        # (C, 1)
    gate = jax.nn.sigmoid(logits)                                             # (C, 1)

    # --- scale: broadcast channel gate over spatial positions, in input dtype ---
    o_ref[...] = (x * gate.astype(x.dtype)).astype(o_ref.dtype)


def se_block(x, w1, b1, w2, b2):
    """x: (N, C, H, W); w1: (C//r, C); b1: (C//r,); w2: (C, C//r); b2: (C,)."""
    N, C, H, W = x.shape
    Cr = w1.shape[0]
    HW = H * W

    # Free view for contiguous NCHW: present a lane-dense (C, HW) slab per step.
    x_flat = x.reshape(N, C, HW)
    b1c = b1.reshape(Cr, 1)
    b2c = b2.reshape(C, 1)

    # VMEM budget: double-buffered input + output blocks, weights, headroom.
    block_bytes = C * HW * jnp.dtype(x.dtype).itemsize
    vmem_limit = int(min(64 * 1024 * 1024,
                         max(32 * 1024 * 1024, 6 * block_bytes + (1 << 20))))

    out_flat = pl.pallas_call(
        se_block_kernel,
        out_shape=jax.ShapeDtypeStruct((N, C, HW), x.dtype),
        grid_spec=pltpu.PrefetchScalarGridSpec(
            num_scalar_prefetch=0,
            grid=(N,),
            in_specs=[
                pl.BlockSpec((pl.Squeezed(), C, HW), lambda i: (i, 0, 0)),
                pl.BlockSpec((Cr, C), lambda i: (0, 0)),
                pl.BlockSpec((Cr, 1), lambda i: (0, 0)),
                pl.BlockSpec((C, Cr), lambda i: (0, 0)),
                pl.BlockSpec((C, 1), lambda i: (0, 0)),
            ],
            out_specs=pl.BlockSpec((pl.Squeezed(), C, HW), lambda i: (i, 0, 0)),
        ),
        compiler_params=pltpu.CompilerParams(
            dimension_semantics=("parallel",),
            vmem_limit_bytes=vmem_limit),
    )(x_flat, w1, b1c, w2, b2c)

    return out_flat.reshape(N, C, H, W)


def se_block_ref(x, w1, b1, w2, b2):
    """Pure-JAX reference matching the PyTorch forward."""
    x_avg = jnp.mean(x, axis=(2, 3))            # (n, c)
    x_max = jnp.max(x, axis=(2, 3))             # (n, c)

    def fc(v):
        hdn = jnp.maximum(v @ w1.T + b1, 0.0)
        return hdn @ w2.T + b2

    gate = jax.nn.sigmoid(fc(x_avg) + fc(x_max))
    return x * gate[:, :, None, None]


if __name__ == "__main__":
    # Small, deterministic shapes consistent with the module:
    # in_channels=32, reduce_ratio=16 -> hidden=2.
    N, C, H, W = 2, 32, 16, 16
    R = 16
    Cr = C // R

    key = jax.random.PRNGKey(0)
    kx, kw1, kb1, kw2, kb2 = jax.random.split(key, 5)

    x = jax.random.normal(kx, (N, C, H, W), dtype=jnp.float32)
    # Deterministic synthetic parameters (Linear weight shapes per nn.Linear).
    w1 = jax.random.normal(kw1, (Cr, C), dtype=jnp.float32) * 0.1
    b1 = jax.random.normal(kb1, (Cr,), dtype=jnp.float32) * 0.1
    w2 = jax.random.normal(kw2, (C, Cr), dtype=jnp.float32) * 0.1
    b2 = jax.random.normal(kb2, (C,), dtype=jnp.float32) * 0.1

    out = se_block(x, w1, b1, w2, b2)
    out = jax.block_until_ready(out)

    ref = se_block_ref(x, w1, b1, w2, b2)
    assert out.shape == (N, C, H, W)
    assert jnp.allclose(out, ref, atol=1e-5, rtol=1e-5), "mismatch vs reference"

    print("KERNEL_OK")
</pallas_src>

<mosaic_0001>
module attributes {stable_mosaic.version = 11 : i64} {
  func.func @se_block_kernel(%arg0: i32, %arg1: memref<1x32x256xf32, #tpu.memory_space<vmem>>, %arg2: memref<2x32xf32, #tpu.memory_space<vmem>>, %arg3: memref<2x1xf32, #tpu.memory_space<vmem>>, %arg4: memref<32x2xf32, #tpu.memory_space<vmem>>, %arg5: memref<32x1xf32, #tpu.memory_space<vmem>>, %arg6: memref<1x32x256xf32, #tpu.memory_space<vmem>>) attributes {dimension_semantics = [#tpu.dimension_semantics<parallel>], iteration_bounds = array<i64: 2>, scalar_prefetch = 0 : i64, scratch_operands = 0 : i64, tpu.core_type = #tpu.core_type<tc>, window_params = [{transform_indices = @transform_0, window_bounds = array<i64: 1, 32, 256>}, {pipeline_mode = #tpu.pipeline_mode<synchronous>, transform_indices = @transform_1, window_bounds = array<i64: 2, 32>}, {pipeline_mode = #tpu.pipeline_mode<synchronous>, transform_indices = @transform_2, window_bounds = array<i64: 2, 1>}, {pipeline_mode = #tpu.pipeline_mode<synchronous>, transform_indices = @transform_3, window_bounds = array<i64: 32, 2>}, {pipeline_mode = #tpu.pipeline_mode<synchronous>, transform_indices = @transform_4, window_bounds = array<i64: 32, 1>}, {transform_indices = @transform_5, window_bounds = array<i64: 1, 32, 256>}]} {
    %c0 = arith.constant 0 : index
    %c0_0 = arith.constant 0 : index
    %c0_1 = arith.constant 0 : index
    %0 = vector.load %arg1[%c0, %c0_0, %c0_1] : memref<1x32x256xf32, #tpu.memory_space<vmem>>, vector<1x32x256xf32>
    %1 = vector.shape_cast %0 : vector<1x32x256xf32> to vector<32x256xf32>
    %cst = arith.constant dense<0.000000e+00> : vector<32xf32>
    %2 = vector.multi_reduction <add>, %1, %cst [1] : vector<32x256xf32> to vector<32xf32>
    %3 = vector.shape_cast %2 : vector<32xf32> to vector<32x1xf32>
    %cst_2 = arith.constant 3.906250e-03 : f32
    %4 = vector.broadcast %cst_2 : f32 to vector<32x1xf32>
    %5 = arith.mulf %3, %4 : vector<32x1xf32>
    %cst_3 = arith.constant dense<0xFF800000> : vector<32xf32>
    %6 = vector.multi_reduction <maximumf>, %1, %cst_3 [1] : vector<32x256xf32> to vector<32xf32>
    %7 = vector.shape_cast %6 : vector<32xf32> to vector<32x1xf32>
    %8 = tpu.concatenate %5, %7 in 1 : vector<32x1xf32>, vector<32x1xf32> -> vector<32x2xf32>
    %c0_4 = arith.constant 0 : index
    %c0_5 = arith.constant 0 : index
    %9 = vector.load %arg2[%c0_4, %c0_5] : memref<2x32xf32, #tpu.memory_space<vmem>>, vector<2x32xf32>
    %c0_6 = arith.constant 0 : index
    %c0_7 = arith.constant 0 : index
    %10 = vector.load %arg3[%c0_6, %c0_7] : memref<2x1xf32, #tpu.memory_space<vmem>>, vector<2x1xf32>
    %c0_8 = arith.constant 0 : index
    %c0_9 = arith.constant 0 : index
    %11 = vector.load %arg4[%c0_8, %c0_9] : memref<32x2xf32, #tpu.memory_space<vmem>>, vector<32x2xf32>
    %c0_10 = arith.constant 0 : index
    %c0_11 = arith.constant 0 : index
    %12 = vector.load %arg5[%c0_10, %c0_11] : memref<32x1xf32, #tpu.memory_space<vmem>>, vector<32x1xf32>
    %cst_12 = arith.constant dense<0.000000e+00> : vector<2x2xf32>
    %13 = tpu.matmul %9, %8, %cst_12 {dimension_numbers = #tpu.dot_dimension_numbers<[1], [0], [0], [1], [0, 0, 1, 1], [], []>} : vector<2x32xf32>, vector<32x2xf32>, vector<2x2xf32> -> vector<2x2xf32>
    %14 = vector.broadcast %10 : vector<2x1xf32> to vector<2x2xf32>
    %15 = arith.addf %13, %14 : vector<2x2xf32>
    %cst_13 = arith.constant 0.000000e+00 : f32
    %16 = vector.broadcast %cst_13 : f32 to vector<2x2xf32>
    %17 = arith.maximumf %15, %16 : vector<2x2xf32>
    %cst_14 = arith.constant dense<0.000000e+00> : vector<32x2xf32>
    %18 = tpu.matmul %11, %17, %cst_14 {dimension_numbers = #tpu.dot_dimension_numbers<[1], [0], [0], [1], [0, 0, 1, 1], [], []>} : vector<32x2xf32>, vector<2x2xf32>, vector<32x2xf32> -> vector<32x2xf32>
    %19 = vector.broadcast %12 : vector<32x1xf32> to vector<32x2xf32>
    %20 = arith.addf %18, %19 : vector<32x2xf32>
    %21 = vector.extract_strided_slice %20 {offsets = [0, 0], sizes = [32, 1], strides = [1, 1]} : vector<32x2xf32> to vector<32x1xf32>
    %22 = vector.extract_strided_slice %20 {offsets = [0, 1], sizes = [32, 1], strides = [1, 1]} : vector<32x2xf32> to vector<32x1xf32>
    %23 = arith.addf %21, %22 : vector<32x1xf32>
    %24 = arith.negf %23 : vector<32x1xf32>
    %25 = math.exp %24 : vector<32x1xf32>
    %cst_15 = arith.constant 1.000000e+00 : f32
    %26 = vector.broadcast %cst_15 : f32 to vector<32x1xf32>
    %27 = arith.addf %26, %25 : vector<32x1xf32>
    %28 = arith.divf %26, %27 : vector<32x1xf32>
    %29 = vector.broadcast %28 : vector<32x1xf32> to vector<32x256xf32>
    %30 = arith.mulf %1, %29 : vector<32x256xf32>
    %c0_16 = arith.constant 0 : index
    %c0_17 = arith.constant 0 : index
    %c0_18 = arith.constant 0 : index
    %31 = vector.load %arg6[%c0_16, %c0_17, %c0_18] : memref<1x32x256xf32, #tpu.memory_space<vmem>>, vector<1x32x256xf32>
    %32 = vector.shape_cast %31 : vector<1x32x256xf32> to vector<32x256xf32>
    %33 = vector.shape_cast %30 : vector<32x256xf32> to vector<1x32x256xf32>
    tpu.vector_store %arg6[%c0_16, %c0_17, %c0_18], %33 {strides = array<i32>} : memref<1x32x256xf32, #tpu.memory_space<vmem>>, vector<1x32x256xf32>,
    return
  }
  func.func @transform_0(%arg0: i32) -> (i32, i32, i32) {
    %c0_i32 = arith.constant 0 : i32
    %c0_i32_0 = arith.constant 0 : i32
    %c0_i32_1 = arith.constant 0 : i32
    return %arg0, %c0_i32, %c0_i32_0 : i32, i32, i32
  }
  func.func @transform_1(%arg0: i32) -> (i32, i32) {
    %c0_i32 = arith.constant 0 : i32
    %c0_i32_0 = arith.constant 0 : i32
    %c0_i32_1 = arith.constant 0 : i32
    return %c0_i32, %c0_i32_0 : i32, i32
  }
  func.func @transform_2(%arg0: i32) -> (i32, i32) {
    %c0_i32 = arith.constant 0 : i32
    %c0_i32_0 = arith.constant 0 : i32
    %c0_i32_1 = arith.constant 0 : i32
    return %c0_i32, %c0_i32_0 : i32, i32
  }
  func.func @transform_3(%arg0: i32) -> (i32, i32) {
    %c0_i32 = arith.constant 0 : i32
    %c0_i32_0 = arith.constant 0 : i32
    %c0_i32_1 = arith.constant 0 : i32
    return %c0_i32, %c0_i32_0 : i32, i32
  }
  func.func @transform_4(%arg0: i32) -> (i32, i32) {
    %c0_i32 = arith.constant 0 : i32
    %c0_i32_0 = arith.constant 0 : i32
    %c0_i32_1 = arith.constant 0 : i32
    return %c0_i32, %c0_i32_0 : i32, i32
  }
  func.func @transform_5(%arg0: i32) -> (i32, i32, i32) {
    %c0_i32 = arith.constant 0 : i32
    %c0_i32_0 = arith.constant 0 : i32
    %c0_i32_1 = arith.constant 0 : i32
    return %arg0, %c0_i32, %c0_i32_0 : i32, i32, i32
  }
}

</mosaic_0001>

<llo_original>
// kernel: tpu_custom_call.1
$region0: #{tpu_custom_call.1}
  #allocation0 [shape = 'u32[]', space=smem, size = 0x4, offset = 0x4, fixed_abs, tag = 'smem constant byte address 0x4 - core index']
  #allocation1 [shape = 'u32[144,128]{1,0:T(1,128)}', space=vmem, size = 0x12000, scoped, tag = 'internal scratch']
  %s0 = inlined_call_operand.hbm [shape: f32[2,32,256], index: 0, kind: input, shape index: {}]
  %s1 = inlined_call_operand.vmem [shape: f32[2,32], index: 1, kind: input, shape index: {}]
  %s2 = inlined_call_operand.vmem [shape: f32[2,1], index: 2, kind: input, shape index: {}]
  %s3 = inlined_call_operand.vmem [shape: f32[32,2], index: 3, kind: input, shape index: {}]
  %s4 = inlined_call_operand.vmem [shape: f32[32,1], index: 4, kind: input, shape index: {}]
  %s5 = inlined_call_operand.hbm [shape: f32[2,32,256], index: 5, kind: output, shape index: {}]
  %s6 = sld [smem:[#allocation0]]
  $region57: #{tpu_custom_call.1} parent=0
    _
  %s8 = ssub.s32 1, %s6
  %s9 = scalar_select 0, %s8, %s6
  $region1: #{tpu_custom_call.1} parent=0
    #allocation2 [shape = 'u8[65536]{0}', space=vmem, size = 0x10000, scoped, tag = 'input window, operand 0']
    #allocation3 [shape = 's32[2]{0}', space=sflag, size = 0x8, scoped, tag = 'scoped memory for tpu_custom_call.1']
    #allocation4 [shape = 's32[2]{0}', space=sflag, size = 0x8, scoped, tag = 'scoped memory for tpu_custom_call.1']
    #allocation5 [shape = 'u8[65536]{0}', space=vmem, size = 0x10000, scoped, tag = 'output window, operand 0']
    %10 = vsyncpa [#allocation3], 0
    %s11 = scalar_lea.sflag [#allocation3], 1
    %12 = vsyncpa %s11, 0
    %13 = vsyncpa [#allocation4], 0
    %s14 = scalar_lea.sflag [#allocation4], 1
    %15 = vsyncpa %s14, 0
    loop: start=0, step=1, limit=4
    $region2: #{tpu_custom_call.1} parent=1 // loop_pre_header
      _
    $region3: #{tpu_custom_call.1} parent=1 // loop_header
      %s17 = sphi 0, %s21
      %p18 = scmp.ge.s32.totalorder %s17, 4
      %s27 = sphi 0, %s29
      %s30 = sphi 0, %s27
      %s31 = sphi 0, %s30
      %s47 = sphi 0, %s31
      %s51 = sphi 0, %s51
      %s53 = sphi 0, %s51
      %s54 = sphi 0, %s53
      %s68 = sphi 0, %s54
      %s72 = sphi 0, %s72
      %s74 = sphi 0, %s72
      %s75 = sphi 0, %s74
      %s89 = sphi 0, %s75
      %s93 = sphi 0, %s93
      %s95 = sphi 0, %s93
      %s96 = sphi 0, %s95
      %s110 = sphi 0, %s96
      %s114 = sphi 0, %s114
      %s116 = sphi 0, %s114
      %s117 = sphi 0, %s116
      %s131 = sphi 0, %s117
      %s137 = sphi 0, %s139
      %s140 = sphi 0, %s137
      %s141 = sphi 0, %s140
      %s157 = sphi 0, %s141
    $region4: #{tpu_custom_call.1} parent=1 // loop_header_branch
      %20 = sbr.rel (%p18) target = $region8
    $region5: #{tpu_custom_call.1} parent=1 // loop_body
      %s22 = ssub.s32 %s17, 1
      %s23 = ssub.s32 %s17, 2
      %s24 = sadd.s32 %s17, 1
      %s25 = ssub.s32 %s17, %s24
      %p26 = scmp.eq.s32.totalorder %s25, 0
      %s28 = sadd.s32 %s27, 1
      %s29 = scalar_select %p26, %s27, %s28
      %p32 = pneg %p26
      %p33 = scmp.eq.s32.totalorder %s17, 1
      %p34 = por %p32, %p33
      %p35 = scmp.ne.s32.totalorder %s27, %s30
      %p36 = scmp.eq.s32.totalorder %s17, 0
      %p37 = por %p35, %p36
      %p38 = scmp.ne.s32.totalorder %s27, %s30
      %p39 = scmp.eq.s32.totalorder %s22, 1
      %p40 = por %p38, %p39
      %p41 = scmp.ne.s32.totalorder %s30, %s31
      %p42 = scmp.eq.s32.totalorder %s22, 0
      %p43 = por %p41, %p42
      %p44 = scmp.ne.s32.totalorder %s30, %s31
      %p45 = scmp.eq.s32.totalorder %s23, 1
      %p46 = por %p44, %p45
      %p48 = scmp.ne.s32.totalorder %s31, %s47
      %p49 = scmp.eq.s32.totalorder %s23, 0
      %p50 = por %p48, %p49
      %s52 = sadd.s32 %s51, 1
      %p55 = scmp.eq.s32.totalorder %s17, 1
      %p56 = scmp.ne.s32.totalorder %s51, %s53
      %p57 = scmp.eq.s32.totalorder %s17, 0
      %p58 = por %p56, %p57
      %p59 = scmp.ne.s32.totalorder %s51, %s53
      %p60 = scmp.eq.s32.totalorder %s22, 1
      %p61 = por %p59, %p60
      %p62 = scmp.ne.s32.totalorder %s53, %s54
      %p63 = scmp.eq.s32.totalorder %s22, 0
      %p64 = por %p62, %p63
      %p65 = scmp.ne.s32.totalorder %s53, %s54
      %p66 = scmp.eq.s32.totalorder %s23, 1
      %p67 = por %p65, %p66
      %p69 = scmp.ne.s32.totalorder %s54, %s68
      %p70 = scmp.eq.s32.totalorder %s23, 0
      %p71 = por %p69, %p70
      %s73 = sadd.s32 %s72, 1
      %p76 = scmp.eq.s32.totalorder %s17, 1
      %p77 = scmp.ne.s32.totalorder %s72, %s74
      %p78 = scmp.eq.s32.totalorder %s17, 0
      %p79 = por %p77, %p78
      %p80 = scmp.ne.s32.totalorder %s72, %s74
      %p81 = scmp.eq.s32.totalorder %s22, 1
      %p82 = por %p80, %p81
      %p83 = scmp.ne.s32.totalorder %s74, %s75
      %p84 = scmp.eq.s32.totalorder %s22, 0
      %p85 = por %p83, %p84
      %p86 = scmp.ne.s32.totalorder %s74, %s75
      %p87 = scmp.eq.s32.totalorder %s23, 1
      %p88 = por %p86, %p87
      %p90 = scmp.ne.s32.totalorder %s75, %s89
      %p91 = scmp.eq.s32.totalorder %s23, 0
      %p92 = por %p90, %p91
      %s94 = sadd.s32 %s93, 1
      %p97 = scmp.eq.s32.totalorder %s17, 1
      %p98 = scmp.ne.s32.totalorder %s93, %s95
      %p99 = scmp.eq.s32.totalorder %s17, 0
      %p100 = por %p98, %p99
      %p101 = scmp.ne.s32.totalorder %s93, %s95
      %p102 = scmp.eq.s32.totalorder %s22, 1
      %p103 = por %p101, %p102
      %p104 = scmp.ne.s32.totalorder %s95, %s96
      %p105 = scmp.eq.s32.totalorder %s22, 0
      %p106 = por %p104, %p105
      %p107 = scmp.ne.s32.totalorder %s95, %s96
      %p108 = scmp.eq.s32.totalorder %s23, 1
      %p109 = por %p107, %p108
      %p111 = scmp.ne.s32.totalorder %s96, %s110
      %p112 = scmp.eq.s32.totalorder %s23, 0
      %p113 = por %p111, %p112
      %s115 = sadd.s32 %s114, 1
      %p118 = scmp.eq.s32.totalorder %s17, 1
      %p119 = scmp.ne.s32.totalorder %s114, %s116
      %p120 = scmp.eq.s32.totalorder %s17, 0
      %p121 = por %p119, %p120
      %p122 = scmp.ne.s32.totalorder %s114, %s116
      %p123 = scmp.eq.s32.totalorder %s22, 1
      %p124 = por %p122, %p123
      %p125 = scmp.ne.s32.totalorder %s116, %s117
      %p126 = scmp.eq.s32.totalorder %s22, 0
      %p127 = por %p125, %p126
      %p128 = scmp.ne.s32.totalorder %s116, %s117
      %p129 = scmp.eq.s32.totalorder %s23, 1
      %p130 = por %p128, %p129
      %p132 = scmp.ne.s32.totalorder %s117, %s131
      %p133 = scmp.eq.s32.totalorder %s23, 0
      %p134 = por %p132, %p133
      %s135 = ssub.s32 %s17, %s24
      %p136 = scmp.eq.s32.totalorder %s135, 0
      %s138 = sadd.s32 %s137, 1
      %s139 = scalar_select %p136, %s137, %s138
      %p142 = pneg %p136
      %p143 = scmp.eq.s32.totalorder %s17, 1
      %p144 = por %p142, %p143
      %p145 = scmp.ne.s32.totalorder %s137, %s140
      %p146 = scmp.eq.s32.totalorder %s17, 0
      %p147 = por %p145, %p146
      %p148 = scmp.ne.s32.totalorder %s137, %s140
      %p149 = scmp.eq.s32.totalorder %s22, 1
      %p150 = por %p148, %p149
      %p151 = scmp.ne.s32.totalorder %s140, %s141
      %p152 = scmp.eq.s32.totalorder %s22, 0
      %p153 = por %p151, %p152
      %p154 = scmp.ne.s32.totalorder %s140, %s141
      %p155 = scmp.eq.s32.totalorder %s23, 1
      %p156 = por %p154, %p155
      %p158 = scmp.ne.s32.totalorder %s141, %s157
      %p159 = scmp.eq.s32.totalorder %s23, 0
      %p160 = por %p158, %p159
      %p161 = scmp.le.s32.totalorder 1, %s17
      %p162 = scmp.lt.s32.totalorder %s17, 3
      %p163 = pnand %p161, %p162
      %p164 = pneg %p163
      // Predicated region
      $region9: #{tpu_custom_call.1} parent=5 // pred_check
        _
      $region10: #{tpu_custom_call.1} parent=5 // pred_check_branch
        %166 = sbr.rel (%p163) target = $region12
      $region11: #{tpu_custom_call.1} parent=5 // pred_region
        %s167 = ssub.s32 %s17, 1
        // Predicated region
        $region13: #{tpu_custom_call.1} parent=11 // pred_check
          %p168 = pneg %p64
        $region14: #{tpu_custom_call.1} parent=11 // pred_check_branch
          %170 = sbr.rel (%p168) target = $region16
        $region15: #{tpu_custom_call.1} parent=11 // pred_region
          _
        $region16: #{tpu_custom_call.1} parent=11 // pred_fallthru
          _
        // Predicated region
        $region17: #{tpu_custom_call.1} parent=11 // pred_check
          %p171 = pneg %p85
        $region18: #{tpu_custom_call.1} parent=11 // pred_check_branch
          %173 = sbr.rel (%p171) target = $region20
        $region19: #{tpu_custom_call.1} parent=11 // pred_region
          _
        $region20: #{tpu_custom_call.1} parent=11 // pred_fallthru
          _
        // Predicated region
        $region21: #{tpu_custom_call.1} parent=11 // pred_check
          %p174 = pneg %p106
        $region22: #{tpu_custom_call.1} parent=11 // pred_check_branch
          %176 = sbr.rel (%p174) target = $region24
        $region23: #{tpu_custom_call.1} parent=11 // pred_region
          _
        $region24: #{tpu_custom_call.1} parent=11 // pred_fallthru
          _
        // Predicated region
        $region25: #{tpu_custom_call.1} parent=11 // pred_check
          %p177 = pneg %p127
        $region26: #{tpu_custom_call.1} parent=11 // pred_check_branch
          %179 = sbr.rel (%p177) target = $region28
        $region27: #{tpu_custom_call.1} parent=11 // pred_region
          _
        $region28: #{tpu_custom_call.1} parent=11 // pred_fallthru
          _
      $region12: #{tpu_custom_call.1} parent=5 // pred_fallthru
        _
      %p180 = scmp.lt.s32.totalorder %s17, 2
      // Predicated region
      $region29: #{tpu_custom_call.1} parent=5 // pred_check
        %p181 = pneg %p180
      $region30: #{tpu_custom_call.1} parent=5 // pred_check_branch
        %183 = sbr.rel (%p181) target = $region32
      $region31: #{tpu_custom_call.1} parent=5 // pred_region
        // Predicated region
        $region33: #{tpu_custom_call.1} parent=31 // pred_check
          %p184 = pneg %p37
        $region34: #{tpu_custom_call.1} parent=31 // pred_check_branch
          %186 = sbr.rel (%p184) target = $region36
        $region35: #{tpu_custom_call.1} parent=31 // pred_region
          %s187 = sand.u32 %s27, 1
          %s188 = scalar_lea.sflag [#allocation3], %s187
          %s189 = sand.u32 %s27, 1
          %s190 = smul.addr %s189, 64
          %s191 = scalar_lea.vmem [#allocation2], %s190
          %s193 = ssub.s32 1024, 1024
          %194 = vsyncadd %s188, %s193
          %s195 = smul.addr %s17, 8
          %s196 = smul.addr %s195, 128
          %s197 = scalar_lea.hbm %s0, %s196
          %s198 = sshll.u32 %s191, 4
          %s199 = int_to_ptr.vmem [resolvable:$true] %s198
          %204 = dma.hbm_to_vmem [thread:$0]  %s197, 1024, %s199, %s188, 256, 256, 16
        $region36: #{tpu_custom_call.1} parent=31 // pred_fallthru
          _
      $region32: #{tpu_custom_call.1} parent=5 // pred_fallthru
        _
      %p205 = scmp.le.s32.totalorder 1, %s17
      %p206 = scmp.lt.s32.totalorder %s17, 3
      %p207 = pnand %p205, %p206
      %p208 = pneg %p207
      // Predicated region
      $region37: #{tpu_custom_call.1} parent=5 // pred_check
        _
      $region38: #{tpu_custom_call.1} parent=5 // pred_check_branch
        %210 = sbr.rel (%p207) target = $region40
      $region39: #{tpu_custom_call.1} parent=5 // pred_region
        %s211 = ssub.s32 %s17, 1
        %s212 = sand.u32 %s30, 1
        %s213 = scalar_lea.sflag [#allocation3], %s212
        %s214 = sand.u32 %s30, 1
        %s215 = smul.addr %s214, 64
        %s216 = scalar_lea.vmem [#allocation2], %s215
        // Predicated region
        $region41: #{tpu_custom_call.1} parent=39 // pred_check
          %p217 = pneg %p43
        $region42: #{tpu_custom_call.1} parent=39 // pred_check_branch
          %219 = sbr.rel (%p217) target = $region44
        $region43: #{tpu_custom_call.1} parent=39 // pred_region
          %220 = dma.done %s213, 1024
        $region44: #{tpu_custom_call.1} parent=39 // pred_fallthru
          _
        %s221 = sand.u32 %s30, 1
        %s222 = scalar_lea.sflag [#allocation3], %s221
        %s223 = sand.u32 %s30, 1
        %s224 = smul.addr %s223, 64
        %s225 = scalar_lea.vmem [#allocation2], %s224
        %p226 = pneg %p43
        %p227 = pneg %p40
        %p228 = pneg %p64
        %p229 = pneg %p61
        %p230 = pneg %p85
        %p231 = pneg %p82
        %p232 = pneg %p106
        %p233 = pneg %p103
        %p234 = pneg %p127
        %p235 = pneg %p124
        %p236 = pneg %p153
        %p237 = pneg %p150
        %s238 = sand.u32 %s140, 1
        %s239 = scalar_lea.sflag [#allocation4], %s238
        %s240 = sand.u32 %s140, 1
        %s241 = smul.addr %s240, 64
        %s242 = scalar_lea.vmem [#allocation5], %s241
        %v243 = vld [vmem:[%s216] sm:$0xff]
        %v244 = vld [vmem:[%s216 + $0x8] sm:$0xff]
        %v245 = vld [vmem:[%s216 + $0x10] sm:$0xff]
        %v246 = vld [vmem:[%s216 + $0x18] sm:$0xff]
        %v247 = vld [vmem:[%s216 + $0x20] sm:$0xff]
        %v248 = vld [vmem:[%s216 + $0x28] sm:$0xff]
        %v249 = vld [vmem:[%s216 + $0x30] sm:$0xff]
        %v250 = vld [vmem:[%s216 + $0x38] sm:$0xff]
        %v251 = vadd.f32 %v243, %v244
        %252 = vadd.xlane.f32.xlu0 %v251
        %v253 = vpop.xlane.xlu0 %252
        %v254 = vadd.f32 %v245, %v246
        %255 = vadd.xlane.f32.xlu0 %v254
        %v256 = vpop.xlane.xlu0 %255
        %v257 = vadd.f32 %v247, %v248
        %258 = vadd.xlane.f32.xlu0 %v257
        %v259 = vpop.xlane.xlu0 %258
        %v260 = vadd.f32 %v249, %v250
        %261 = vadd.xlane.f32.xlu0 %v260
        %v262 = vpop.xlane.xlu0 %261
        %v263 = vmul.f32 %v253, 0.00390625
        %v264 = vmul.f32 %v256, 0.00390625
        %v265 = vmul.f32 %v259, 0.00390625
        %v266 = vmul.f32 %v262, 0.00390625
        %v267 = vmax.f32 %v243, %v244
        %268 = vmax.xlane.f32.xlu0 %v267
        %v269 = vpop.xlane.xlu0 %268
        %v270 = vmax.f32 %v245, %v246
        %271 = vmax.xlane.f32.xlu0 %v270
        %v272 = vpop.xlane.xlu0 %271
        %v273 = vmax.f32 %v247, %v248
        %274 = vmax.xlane.f32.xlu0 %v273
        %v275 = vpop.xlane.xlu0 %274
        %v276 = vmax.f32 %v249, %v250
        %277 = vmax.xlane.f32.xlu0 %v276
        %v278 = vpop.xlane.xlu0 %277
        %vm279 = vcmask 7168
        %v280 = vsel %vm279, %v263, %v269
        %v281 = vsel %vm279, %v264, %v272
        %v282 = vsel %vm279, %v265, %v275
        %v283 = vsel %vm279, %v266, %v278
        %v284 = vld [vmem:[%s1] sm:$0x3]
        %v285 = vld [vmem:[%s2] sm:$0x3]
        %v286 = vld [vmem:[%s3] sm:$0xff]
        %v287 = vld [vmem:[%s3 + $0x8] sm:$0xff]
        %v288 = vld [vmem:[%s3 + $0x10] sm:$0xff]
        %v289 = vld [vmem:[%s3 + $0x18] sm:$0xff]
        %v290 = vld [vmem:[%s4] sm:$0xff]
        %v291 = vld [vmem:[%s4 + $0x8] sm:$0xff]
        %v292 = vld [vmem:[%s4 + $0x10] sm:$0xff]
        %v293 = vld [vmem:[%s4 + $0x18] sm:$0xff]
        %295 = vset.pattern.permute.xlu0 0
        %296 = vperm.xlu0 %295, %v285
        %v297 = vpop.permute.xlu0 %296
        %vm299 = vcmask 261120
        %v301 = vsel %vm299, %v284, 0
        %303 = vmatprep.subr.mxu0 0.0
        %304 = vmatpush1.msra.mxu0 0.0
        %305 = vmatprep.subr.mxu0 0.0
        %306 = vmatpush1.msra.mxu0 0.0
        %307 = vmatprep.subr.mxu0 0.0
        %308 = vmatpush1.msra.mxu0 0.0
        %309 = vmatprep.subr.mxu0 0.0
        %310 = vmatpush1.msra.mxu0 0.0
        %311 = vmatprep.subr.mxu0 0.0
        %312 = vmatpush1.msra.mxu0 0.0
        %313 = vmatprep.subr.mxu0 0.0
        %314 = vmatpush1.msra.mxu0 0.0
        %315 = vmatprep.subr.mxu0 0.0
        %316 = vmatpush1.msra.mxu0 0.0
        %317 = vmatprep.subr.mxu0 0.0
        %318 = vmatpush1.msra.mxu0 0.0
        %319 = vmatprep.subr.mxu0 0.0
        %320 = vmatpush1.msra.mxu0 0.0
        %321 = vmatprep.subr.mxu0 0.0
        %322 = vmatpush1.msra.mxu0 0.0
        %323 = vmatprep.subr.mxu0 0.0
        %324 = vmatpush1.msra.mxu0 0.0
        %325 = vmatprep.subr.mxu0 0.0
        %326 = vmatpush1.msra.mxu0 0.0
        %327 = vmatprep.subr.mxu0 0.0
        %328 = vmatpush1.msra.mxu0 %v283
        %329 = vmatprep.subr.mxu0 0.0
        %330 = vmatpush1.msra.mxu0 %v282
        %331 = vmatprep.subr.mxu0 0.0
        %332 = vmatpush1.msra.mxu0 %v281
        %333 = vmatprep.subr.mxu0 0.0
        %334 = vmatpush1.msra.mxu0 %v280
        %335 = vmatprep.subr.mxu0 0.0
        %336 = vmatpush2.msra.mxu0 0.0
        %337 = vmatprep.subr.mxu0 0.0
        %338 = vmatpush2.msra.mxu0 0.0
        %339 = vmatprep.subr.mxu0 0.0
        %340 = vmatpush2.msra.mxu0 0.0
        %341 = vmatprep.subr.mxu0 0.0
        %342 = vmatpush2.msra.mxu0 0.0
        %343 = vmatprep.subr.mxu0 0.0
        %344 = vmatpush2.msra.mxu0 0.0
        %345 = vmatprep.subr.mxu0 0.0
        %346 = vmatpush2.msra.mxu0 0.0
        %347 = vmatprep.subr.mxu0 0.0
        %348 = vmatpush2.msra.mxu0 0.0
        %349 = vmatprep.subr.mxu0 0.0
        %350 = vmatpush2.msra.mxu0 0.0
        %351 = vmatprep.subr.mxu0 0.0
        %352 = vmatpush2.msra.mxu0 0.0
        %353 = vmatprep.subr.mxu0 0.0
        %354 = vmatpush2.msra.mxu0 0.0
        %355 = vmatprep.subr.mxu0 0.0
        %356 = vmatpush2.msra.mxu0 0.0
        %357 = vmatprep.subr.mxu0 0.0
        %358 = vmatpush2.msra.mxu0 0.0
        %359 = vmatprep.subr.mxu0 0.0
        %360 = vmatpush2.msra.mxu0 0.0
        %361 = vmatprep.subr.mxu0 0.0
        %362 = vmatpush2.msra.mxu0 0.0
        %363 = vmatprep.subr.mxu0 0.0
        %364 = vmatpush2.msra.mxu0 0.0
        %365 = vmatprep.subr.mxu0 0.0
        %366 = vmatpush2.msra.mxu0 0.0
        %367 = vmatprep.mubr.f32.mxu0 0.0
        %368 = vmatmul.mubr.f32.gmra.mxu0 %v301
        %v369 = vpop.f32.mrf.mxu0
        %v370 = vadd.f32 %v297, %v369
        %v371 = vpop.f32.mrf.mxu0
        %372 = vdwg.mxu0
        %v373 = vmax.f32 %v370, 0.0
        %375 = vset.pattern.permute.xlu0 0
        %376 = vperm.xlu0 %375, %v290
        %v377 = vpop.permute.xlu0 %376
        %380 = vset.pattern.permute.xlu0 0
        %381 = vperm.xlu0 %380, %v291
        %v382 = vpop.permute.xlu0 %381
        %385 = vset.pattern.permute.xlu0 0
        %386 = vperm.xlu0 %385, %v292
        %v387 = vpop.permute.xlu0 %386
        %390 = vset.pattern.permute.xlu0 0
        %391 = vperm.xlu0 %390, %v293
        %v392 = vpop.permute.xlu0 %391
        %vm394 = vcmask 15360
        %v396 = vsel %vm394, %v286, 0
        %v399 = vsel %vm394, %v287, 0
        %v402 = vsel %vm394, %v288, 0
        %v405 = vsel %vm394, %v289, 0
        %vm407 = vcmask 1041408
        %v409 = vsel %vm407, %v373, 0
        %411 = vmatprep.subr.mxu0 0.0
        %412 = vmatpush1.msra.mxu0 0.0
        %413 = vmatprep.subr.mxu0 0.0
        %414 = vmatpush1.msra.mxu0 0.0
        %415 = vmatprep.subr.mxu0 0.0
        %416 = vmatpush1.msra.mxu0 0.0
        %417 = vmatprep.subr.mxu0 0.0
        %418 = vmatpush1.msra.mxu0 0.0
        %419 = vmatprep.subr.mxu0 0.0
        %420 = vmatpush1.msra.mxu0 0.0
        %421 = vmatprep.subr.mxu0 0.0
        %422 = vmatpush1.msra.mxu0 0.0
        %423 = vmatprep.subr.mxu0 0.0
        %424 = vmatpush1.msra.mxu0 0.0
        %425 = vmatprep.subr.mxu0 0.0
        %426 = vmatpush1.msra.mxu0 0.0
        %427 = vmatprep.subr.mxu0 0.0
        %428 = vmatpush1.msra.mxu0 0.0
        %429 = vmatprep.subr.mxu0 0.0
        %430 = vmatpush1.msra.mxu0 0.0
        %431 = vmatprep.subr.mxu0 0.0
        %432 = vmatpush1.msra.mxu0 0.0
        %433 = vmatprep.subr.mxu0 0.0
        %434 = vmatpush1.msra.mxu0 0.0
        %435 = vmatprep.subr.mxu0 0.0
        %436 = vmatpush1.msra.mxu0 0.0
        %437 = vmatprep.subr.mxu0 0.0
        %438 = vmatpush1.msra.mxu0 0.0
        %439 = vmatprep.subr.mxu0 0.0
        %440 = vmatpush1.msra.mxu0 0.0
        %441 = vmatprep.subr.mxu0 0.0
        %442 = vmatpush1.msra.mxu0 %v409
        %443 = vmatprep.subr.mxu0 0.0
        %444 = vmatpush2.msra.mxu0 0.0
        %445 = vmatprep.subr.mxu0 0.0
        %446 = vmatpush2.msra.mxu0 0.0
        %447 = vmatprep.subr.mxu0 0.0
        %448 = vmatpush2.msra.mxu0 0.0
        %449 = vmatprep.subr.mxu0 0.0
        %450 = vmatpush2.msra.mxu0 0.0
        %451 = vmatprep.subr.mxu0 0.0
        %452 = vmatpush2.msra.mxu0 0.0
        %453 = vmatprep.subr.mxu0 0.0
        %454 = vmatpush2.msra.mxu0 0.0
        %455 = vmatprep.subr.mxu0 0.0
        %456 = vmatpush2.msra.mxu0 0.0
        %457 = vmatprep.subr.mxu0 0.0
        %458 = vmatpush2.msra.mxu0 0.0
        %459 = vmatprep.subr.mxu0 0.0
        %460 = vmatpush2.msra.mxu0 0.0
        %461 = vmatprep.subr.mxu0 0.0
        %462 = vmatpush2.msra.mxu0 0.0
        %463 = vmatprep.subr.mxu0 0.0
        %464 = vmatpush2.msra.mxu0 0.0
        %465 = vmatprep.subr.mxu0 0.0
        %466 = vmatpush2.msra.mxu0 0.0
        %467 = vmatprep.subr.mxu0 0.0
        %468 = vmatpush2.msra.mxu0 0.0
        %469 = vmatprep.subr.mxu0 0.0
        %470 = vmatpush2.msra.mxu0 0.0
        %471 = vmatprep.subr.mxu0 0.0
        %472 = vmatpush2.msra.mxu0 0.0
        %473 = vmatprep.subr.mxu0 0.0
        %474 = vmatpush2.msra.mxu0 0.0
        %475 = vmatprep.mubr.f32.mxu0 0.0
        %476 = vmatmul.mubr.f32.gmra.mxu0 %v396
        %v477 = vpop.f32.mrf.mxu0
        %v478 = vadd.f32 %v377, %v477
        %v479 = vpop.f32.mrf.mxu0
        %480 = vmatprep.mubr.f32.mxu0 0.0
        %481 = vmatmul.mubr.f32.gmra.mxu0 %v399
        %v482 = vpop.f32.mrf.mxu0
        %v483 = vadd.f32 %v382, %v482
        %v484 = vpop.f32.mrf.mxu0
        %485 = vmatprep.mubr.f32.mxu0 0.0
        %486 = vmatmul.mubr.f32.gmra.mxu0 %v402
        %v487 = vpop.f32.mrf.mxu0
        %v488 = vadd.f32 %v387, %v487
        %v489 = vpop.f32.mrf.mxu0
        %490 = vmatprep.mubr.f32.mxu0 0.0
        %491 = vmatmul.mubr.f32.gmra.mxu0 %v405
        %v492 = vpop.f32.mrf.mxu0
        %v493 = vadd.f32 %v392, %v492
        %v494 = vpop.f32.mrf.mxu0
        %495 = vdwg.mxu0
        %500 = vrot.lane.b32.xlu0 %v478, 127
        %v501 = vpop.permute.xlu0 %500
        %502 = vrot.lane.b32.xlu0 %v483, 127
        %v503 = vpop.permute.xlu0 %502
        %504 = vrot.lane.b32.xlu0 %v488, 127
        %v505 = vpop.permute.xlu0 %504
        %506 = vrot.lane.b32.xlu0 %v493, 127
        %v507 = vpop.permute.xlu0 %506
        %v512 = vadd.f32 %v478, %v501
        %v513 = vadd.f32 %v483, %v503
        %v514 = vadd.f32 %v488, %v505
        %v515 = vadd.f32 %v493, %v507
        %v516 = vxor.u32 %v512, 2147483648
        %v517 = vxor.u32 %v513, 2147483648
        %v518 = vxor.u32 %v514, 2147483648
        %v519 = vxor.u32 %v515, 2147483648
        %v520 = vmul.f32 %v516, 1.442695
        %v521 = vpow.pop %v520
        %v522 = vmul.f32 %v517, 1.442695
        %v523 = vpow.pop %v522
        %v524 = vmul.f32 %v518, 1.442695
        %v525 = vpow.pop %v524
        %v526 = vmul.f32 %v519, 1.442695
        %v527 = vpow.pop %v526
        %v528 = vadd.f32 %v521, 1.0
        %v529 = vadd.f32 %v523, 1.0
        %v530 = vadd.f32 %v525, 1.0
        %v531 = vadd.f32 %v527, 1.0
        %v532 = vrcp.pop %v528
        %v533 = vmul.f32 1.0, %v532
        %v534 = vrcp.pop %v529
        %v535 = vmul.f32 1.0, %v534
        %v536 = vrcp.pop %v530
        %v537 = vmul.f32 1.0, %v536
        %v538 = vrcp.pop %v531
        %v539 = vmul.f32 1.0, %v538
        %541 = vset.pattern.permute.xlu0 0
        %542 = vperm.xlu0 %541, %v533
        %v543 = vpop.permute.xlu0 %542
        %546 = vset.pattern.permute.xlu0 0
        %547 = vperm.xlu0 %546, %v535
        %v548 = vpop.permute.xlu0 %547
        %551 = vset.pattern.permute.xlu0 0
        %552 = vperm.xlu0 %551, %v537
        %v553 = vpop.permute.xlu0 %552
        %556 = vset.pattern.permute.xlu0 0
        %557 = vperm.xlu0 %556, %v539
        %v558 = vpop.permute.xlu0 %557
        %v560 = vmul.f32 %v243, %v543
        %v561 = vmul.f32 %v244, %v543
        %v562 = vmul.f32 %v245, %v548
        %v563 = vmul.f32 %v246, %v548
        %v564 = vmul.f32 %v247, %v553
        %v565 = vmul.f32 %v248, %v553
        %v566 = vmul.f32 %v249, %v558
        %v567 = vmul.f32 %v250, %v558
        %568 = vst [vmem:[%s242] sm:$0xff] %v560
        %569 = vst [vmem:[%s242 + $0x8] sm:$0xff] %v561
        %570 = vst [vmem:[%s242 + $0x10] sm:$0xff] %v562
        %571 = vst [vmem:[%s242 + $0x18] sm:$0xff] %v563
        %572 = vst [vmem:[%s242 + $0x20] sm:$0xff] %v564
        %573 = vst [vmem:[%s242 + $0x28] sm:$0xff] %v565
        %574 = vst [vmem:[%s242 + $0x30] sm:$0xff] %v566
        %575 = vst [vmem:[%s242 + $0x38] sm:$0xff] %v567
        %s576 = sand.u32 %s140, 1
        %s577 = scalar_lea.sflag [#allocation4], %s576
        %s578 = sand.u32 %s140, 1
        %s579 = smul.addr %s578, 64
        %s580 = scalar_lea.vmem [#allocation5], %s579
        // Predicated region
        $region45: #{tpu_custom_call.1} parent=39 // pred_check
          %p581 = pneg %p150
        $region46: #{tpu_custom_call.1} parent=39 // pred_check_branch
          %583 = sbr.rel (%p581) target = $region48
        $region47: #{tpu_custom_call.1} parent=39 // pred_region
          %s585 = ssub.s32 1024, 1024
          %586 = vsyncadd %s577, %s585
          %s587 = smul.addr %s22, 8
          %s588 = smul.addr %s587, 128
          %s589 = scalar_lea.hbm %s5, %s588
          %s590 = sshll.u32 %s580, 4
          %s591 = int_to_ptr.vmem [resolvable:$true] %s590
          %596 = dma.vmem_to_hbm [thread:$0]  %s591, 1024, %s589, %s577, 256, 256, 16
        $region48: #{tpu_custom_call.1} parent=39 // pred_fallthru
          _
      $region40: #{tpu_custom_call.1} parent=5 // pred_fallthru
        _
      %p597 = scmp.le.s32.totalorder 2, %s17
      // Predicated region
      $region49: #{tpu_custom_call.1} parent=5 // pred_check
        %p598 = pneg %p597
      $region50: #{tpu_custom_call.1} parent=5 // pred_check_branch
        %600 = sbr.rel (%p598) target = $region52
      $region51: #{tpu_custom_call.1} parent=5 // pred_region
        %s601 = ssub.s32 %s17, 2
        // Predicated region
        $region53: #{tpu_custom_call.1} parent=51 // pred_check
          %p602 = pneg %p156
        $region54: #{tpu_custom_call.1} parent=51 // pred_check_branch
          %604 = sbr.rel (%p602) target = $region56
        $region55: #{tpu_custom_call.1} parent=51 // pred_region
          %s605 = sand.u32 %s141, 1
          %s606 = scalar_lea.sflag [#allocation4], %s605
          %s607 = sand.u32 %s141, 1
          %s608 = smul.addr %s607, 64
          %s609 = scalar_lea.vmem [#allocation5], %s608
          %610 = dma.done %s606, 1024
        $region56: #{tpu_custom_call.1} parent=51 // pred_fallthru
          _
      $region52: #{tpu_custom_call.1} parent=5 // pred_fallthru
        _
    $region6: #{tpu_custom_call.1} parent=1 // loop_footer
      %s21 = sadd.s32 1, %s17
    $region7: #{tpu_custom_call.1} parent=1 // loop_footer_branch
      %16 = sbr.rel target = $region3
    $region8: #{tpu_custom_call.1} parent=1 // loop_exit
      _
    %611 = vsyncpa [#allocation3], 1
    %s612 = scalar_lea.sflag [#allocation3], 1
    %613 = vsyncpa %s612, 1
    %614 = vsyncpa [#allocation4], 1
    %s615 = scalar_lea.sflag [#allocation4], 1
    %616 = vsyncpa %s615, 1

</llo_original>
